<compile_context>
chip_gen: v5e
topology: v5e:2x2
jax: 0.10.0
libtpu: 0.0.40
codegen_flags: <defaults>
</compile_context>

<pallas_src>
import jax
import jax.numpy as jnp
from jax.experimental import pallas as pl
from jax.experimental.pallas import tpu as pltpu

LANES = 128  # TPU lane width


def affine_kernel(wb_ref, x_ref, o_ref):
    # wb_ref: SMEM (2,) float32 -> [w, b]; x_ref / o_ref: VMEM (tile_r, lanes) tiles.
    w = wb_ref[0]
    b = wb_ref[1]
    x = x_ref[...]
    # Compute in f32 (exact no-op casts for f32 inputs); the VPU FMA is fully
    # hidden under the HBM stream, so the cast costs nothing.
    o_ref[...] = (x.astype(jnp.float32) * w + b).astype(o_ref.dtype)


def _round_up(n, m):
    return ((n + m - 1) // m) * m


def _sublane_multiple(dtype):
    # (8,128) vreg tile for 32-bit; sub-32-bit dtypes pack along sublanes.
    return 32 // jnp.dtype(dtype).itemsize  # f32 -> 8, bf16/f16 -> 16, int8 -> 32


def _pick_lanes(n, preferred):
    # Zero-copy fast path needs n % lanes == 0; try wide first (lane-dense stores).
    for lanes in sorted({preferred, 512, 256, 128}, reverse=True):
        if lanes >= LANES and lanes % LANES == 0 and n % lanes == 0:
            return lanes
    return None


def _pick_tile_rows(rows, sub, lanes, itemsize, tile_rows_hint):
    """Pick a legal, VMEM-friendly row tile.

    Legal = tile_r is a multiple of `sub` OR tile_r == rows (full array dim).
    Aim for ~4 MiB tiles (amortizes per-grid-step overhead, biggest win on v7x)
    while keeping >= 4 grid steps for large inputs so v7x megacore can shard
    row tiles across both TensorCores.
    """
    max_bytes = 6 * 1024 * 1024  # keep (in+out) x 2 buffers well under v7x's 64 MiB VMEM
    max_rows = max(sub, (max_bytes // (lanes * itemsize)) // sub * sub)
    target = max(sub, min(_round_up(tile_rows_hint, sub), max_rows))

    # Small/medium inputs: a single full-dim block is always legal (no (8,128)
    # divisibility issue) and has the least per-step overhead.
    if rows * lanes * itemsize <= max_bytes and (rows < 4 * sub or rows <= target):
        return rows

    # Large inputs: aim for >= 4 grid steps (v7x megacore) without tiny tiles.
    target = min(target, max(sub, _round_up(pl.cdiv(rows, 4), sub)))

    # Prefer a tile that divides `rows` exactly (no partial boundary block).
    cand, steps = target, 0
    while cand >= sub and steps < 64:
        if rows % cand == 0:
            return cand
        cand -= sub
        steps += 1
    # Fall back to a non-dividing multiple of `sub`; Pallas masks the partial
    # boundary block (out-of-bounds output rows are discarded).
    return target


def regression_model_forward(x, w, b, *, lanes=512, tile_rows=2048):
    """y = w * x + b for any-shape x, preserving x's floating dtype."""
    x = jnp.asarray(x)
    if not jnp.issubdtype(x.dtype, jnp.floating):
        x = x.astype(jnp.float32)
    orig_shape = x.shape
    n = x.size
    if n == 0:
        return x

    itemsize = jnp.dtype(x.dtype).itemsize
    sub = _sublane_multiple(x.dtype)
    wb = jnp.stack([jnp.asarray(w, jnp.float32), jnp.asarray(b, jnp.float32)])

    good_lanes = _pick_lanes(n, lanes)
    if good_lanes is not None:
        # Fast path: zero-copy flatten/reshape, no padding, no output slice.
        ln = good_lanes
        rows = n // ln
        slab = x.reshape(rows, ln)
        pad = 0
    else:
        # Ragged fallback: minimal pad to the next lane multiple (one extra HBM
        # pass over x).
        # TODO(synk): handle the ragged tail fully in-kernel (masked pltpu.store
        # on the last row tile / manual DMA with clamped pl.ds) to avoid this copy.
        ln = LANES
        rows = pl.cdiv(n, ln)
        pad = rows * ln - n
        slab = jnp.pad(x.reshape(-1), (0, pad)).reshape(rows, ln)

    tile_r = _pick_tile_rows(rows, sub, ln, itemsize, tile_rows)
    grid = (pl.cdiv(rows, tile_r),)

    out_slab = pl.pallas_call(
        affine_kernel,
        out_shape=jax.ShapeDtypeStruct(slab.shape, slab.dtype),
        grid=grid,
        in_specs=[
            pl.BlockSpec(memory_space=pltpu.MemorySpace.SMEM),   # [w, b] scalars
            pl.BlockSpec((tile_r, ln), lambda i: (i, 0)),        # x row tile
        ],
        out_specs=pl.BlockSpec((tile_r, ln), lambda i: (i, 0)),  # y row tile
        compiler_params=pltpu.CompilerParams(
            # Row-tile axis is independent -> shardable across v7x's 2 TensorCores.
            dimension_semantics=("parallel",),
            # Tiles are capped at ~6 MiB each; in+out double-buffered stays <= ~24 MiB,
            # within this limit and within v7x's 64 MiB physical VMEM per TC.
            vmem_limit_bytes=32 * 1024 * 1024,
        ),
        # input_output_aliases={1: 0} would reuse x's HBM buffer when the caller
        # donates x (halves peak HBM footprint, relevant on v5e's 16 GiB HBM);
        # omitted here because callers (and the checks below) keep x alive.
    )(wb, slab)

    out = out_slab
    if pad:
        out = out.reshape(-1)[:n]
    return out.reshape(orig_shape)


if __name__ == "__main__":
    # RegressionModel.__init__: w = 1.0, b = 1.0.
    w = jnp.float32(1.0)
    b = jnp.float32(1.0)

    # 1) The spec's example input: x = [5, 7, 12, 16, 20].view(-1, 1)  (ragged fallback path).
    x0 = jnp.array([5.0, 7.0, 12.0, 16.0, 20.0], dtype=jnp.float32).reshape(-1, 1)
    y0 = jax.block_until_ready(regression_model_forward(x0, w, b))
    assert y0.shape == x0.shape and jnp.allclose(y0, w * x0 + b), (y0, w * x0 + b)

    key = jax.random.PRNGKey(0)
    k1, k2, k3 = jax.random.split(key, 3)

    # 2) Zero-copy fast path, single block: n = 4096 -> (8, 512) slab, grid = 1.
    x1 = jax.random.normal(k1, (4096, 1), dtype=jnp.float32)
    y1 = jax.block_until_ready(regression_model_forward(x1, w, b))
    assert jnp.allclose(y1, w * x1 + b, atol=1e-6), "fast-path mismatch"

    # 3) Zero-copy fast path, multi-tile grid (pipelining + megacore sharding):
    #    n = 64*512 -> (64, 512) slab, tile_r = 16, grid = 4.
    x2 = jax.random.normal(k2, (64, 512), dtype=jnp.float32)
    y2 = jax.block_until_ready(regression_model_forward(x2, w, b, tile_rows=16))
    assert jnp.allclose(y2, w * x2 + b, atol=1e-6), "multi-tile path mismatch"

    # 4) bf16 input: dtype preserved end-to-end -> half the HBM bytes moved.
    x3 = jax.random.normal(k3, (32, 512), dtype=jnp.bfloat16)
    y3 = jax.block_until_ready(regression_model_forward(x3, w, b))
    ref3 = (w * x3.astype(jnp.float32) + b).astype(jnp.bfloat16)
    assert y3.dtype == jnp.bfloat16 and jnp.allclose(
        y3.astype(jnp.float32), ref3.astype(jnp.float32), atol=1e-2
    ), "bf16 path mismatch"

    print("KERNEL_OK")
</pallas_src>

<mosaic_0001>
module attributes {stable_mosaic.version = 11 : i64} {
  func.func @affine_kernel(%arg0: i32, %arg1: memref<2xf32, #tpu.memory_space<smem>>, %arg2: memref<1x128xf32, #tpu.memory_space<vmem>>, %arg3: memref<1x128xf32, #tpu.memory_space<vmem>>) attributes {dimension_semantics = [#tpu.dimension_semantics<parallel>], iteration_bounds = array<i64: 1>, scalar_prefetch = 0 : i64, scratch_operands = 0 : i64, tpu.core_type = #tpu.core_type<tc>, window_params = [{transform_indices = @transform_0, window_bounds = array<i64: 2>}, {transform_indices = @transform_1, window_bounds = array<i64: 1, 128>}, {transform_indices = @transform_2, window_bounds = array<i64: 1, 128>}]} {
    %c0 = arith.constant 0 : index
    %0 = memref.load %arg1[%c0] : memref<2xf32, #tpu.memory_space<smem>>
    %c1 = arith.constant 1 : index
    %1 = memref.load %arg1[%c1] : memref<2xf32, #tpu.memory_space<smem>>
    %c0_0 = arith.constant 0 : index
    %c0_1 = arith.constant 0 : index
    %2 = vector.load %arg2[%c0_0, %c0_1] : memref<1x128xf32, #tpu.memory_space<vmem>>, vector<1x128xf32>
    %3 = vector.broadcast %0 : f32 to vector<1x128xf32>
    %4 = arith.mulf %2, %3 : vector<1x128xf32>
    %5 = vector.broadcast %1 : f32 to vector<1x128xf32>
    %6 = arith.addf %4, %5 : vector<1x128xf32>
    %c0_2 = arith.constant 0 : index
    %c0_3 = arith.constant 0 : index
    %7 = vector.load %arg3[%c0_2, %c0_3] : memref<1x128xf32, #tpu.memory_space<vmem>>, vector<1x128xf32>
    tpu.vector_store %arg3[%c0_2, %c0_3], %6 {strides = array<i32>} : memref<1x128xf32, #tpu.memory_space<vmem>>, vector<1x128xf32>,
    return
  }
  func.func @transform_0(%arg0: i32) -> i32 {
    %c0_i32 = arith.constant 0 : i32
    %c0_i32_0 = arith.constant 0 : i32
    return %c0_i32 : i32
  }
  func.func @transform_1(%arg0: i32) -> (i32, i32) {
    %c0_i32 = arith.constant 0 : i32
    %c0_i32_0 = arith.constant 0 : i32
    return %arg0, %c0_i32 : i32, i32
  }
  func.func @transform_2(%arg0: i32) -> (i32, i32) {
    %c0_i32 = arith.constant 0 : i32
    %c0_i32_0 = arith.constant 0 : i32
    return %arg0, %c0_i32 : i32, i32
  }
}

</mosaic_0001>

<llo_original>
// kernel: tpu_custom_call.1
$region0: #{tpu_custom_call.1}
  #allocation0 [shape = 'u32[]', space=smem, size = 0x4, offset = 0x4, fixed_abs, tag = 'smem constant byte address 0x4 - core index']
  #allocation1 [shape = 'u32[72,128]{1,0:T(1,128)}', space=vmem, size = 0x9000, scoped, tag = 'internal scratch']
  %s0 = inlined_call_operand.hbm [shape: f32[2], index: 0, kind: input, shape index: {}]
  %s1 = inlined_call_operand.hbm [shape: f32[1,128], index: 1, kind: input, shape index: {}]
  %s2 = inlined_call_operand.hbm [shape: f32[1,128], index: 2, kind: output, shape index: {}]
  %s3 = sld [smem:[#allocation0]]
  $region26: #{tpu_custom_call.1} parent=0
    _
  %s5 = ssub.s32 1, %s3
  %s6 = scalar_select 0, %s5, %s3
  $region1: #{tpu_custom_call.1} parent=0
    #allocation2 [shape = 'u8[512]{0}', space=smem, size = 0x200, scoped, tag = 'input window, operand 0, single buffered']
    #allocation3 [shape = 's32[1]{0}', space=sflag, size = 0x4, scoped, tag = 'scoped memory for tpu_custom_call.1']
    #allocation4 [shape = 's32[1]{0}', space=sflag, size = 0x4, scoped, tag = 'scoped memory for tpu_custom_call.1']
    #allocation5 [shape = 's32[1]{0}', space=sflag, size = 0x4, scoped, tag = 'scoped memory for tpu_custom_call.1']
    #allocation6 [shape = 'u8[512]{0}', space=vmem, size = 0x400, scoped, tag = 'input window, operand 1, single buffered']
    #allocation7 [shape = 'u8[512]{0}', space=vmem, size = 0x400, scoped, tag = 'output window, operand 0, single buffered']
    %7 = vsyncpa [#allocation5], 0
    %8 = vsyncpa [#allocation3], 0
    %9 = vsyncpa [#allocation4], 0
    // Predicated region
    $region2: #{tpu_custom_call.1} parent=1 // pred_check
      _
    $region3: #{tpu_custom_call.1} parent=1 // pred_check_branch
      %11 = sbr.rel (0) target = $region5
    $region4: #{tpu_custom_call.1} parent=1 // pred_region
      %13 = vsyncadd [#allocation5], 0
      %s15 = sshll.u32 %s0, 4
      %s16 = int_to_ptr.hbm [resolvable:$true] %s15
      %18 = dma.hbm_to_smem %s16, 16, [#allocation2], [#allocation5]
    $region5: #{tpu_custom_call.1} parent=1 // pred_fallthru
      _
    // Predicated region
    $region6: #{tpu_custom_call.1} parent=1 // pred_check
      _
    $region7: #{tpu_custom_call.1} parent=1 // pred_check_branch
      %20 = sbr.rel (0) target = $region9
    $region8: #{tpu_custom_call.1} parent=1 // pred_region
      %22 = vsyncadd [#allocation3], 0
      %s24 = sshll.u32 %s1, 4
      %s25 = int_to_ptr.hbm [resolvable:$true] %s24
      %s26 = sshll.u32 [#allocation6], 4
      %s27 = int_to_ptr.vmem [resolvable:$true] %s26
      %29 = dma.hbm_to_vmem [thread:$0]  %s25, 16, %s27, [#allocation3]
    $region9: #{tpu_custom_call.1} parent=1 // pred_fallthru
      _
    // Predicated region
    $region10: #{tpu_custom_call.1} parent=1 // pred_check
      _
    $region11: #{tpu_custom_call.1} parent=1 // pred_check_branch
      %31 = sbr.rel (0) target = $region13
    $region12: #{tpu_custom_call.1} parent=1 // pred_region
      %33 = dma.done [#allocation5], 16
    $region13: #{tpu_custom_call.1} parent=1 // pred_fallthru
      _
    // Predicated region
    $region14: #{tpu_custom_call.1} parent=1 // pred_check
      _
    $region15: #{tpu_custom_call.1} parent=1 // pred_check_branch
      %35 = sbr.rel (0) target = $region17
    $region16: #{tpu_custom_call.1} parent=1 // pred_region
      %37 = dma.done [#allocation3], 16
    $region17: #{tpu_custom_call.1} parent=1 // pred_fallthru
      _
    %38 = sfence
    %s39 = sld [smem:[#allocation2]]
    %s40 = sld [smem:[#allocation2 + $0x1]]
    %v41 = vld [vmem:[#allocation6] sm:$0x1]
    %v42 = vstv %s39
    %v43 = vmul.f32 %v41, %v42
    %v44 = vstv %s40
    %v45 = vadd.f32 %v43, %v44
    %46 = vst [vmem:[#allocation7] sm:$0x1] %v45
    // Predicated region
    $region18: #{tpu_custom_call.1} parent=1 // pred_check
      _
    $region19: #{tpu_custom_call.1} parent=1 // pred_check_branch
      %48 = sbr.rel (0) target = $region21
    $region20: #{tpu_custom_call.1} parent=1 // pred_region
      %50 = vsyncadd [#allocation4], 0
      %s52 = sshll.u32 [#allocation7], 4
      %s53 = int_to_ptr.vmem [resolvable:$true] %s52
      %s54 = sshll.u32 %s2, 4
      %s55 = int_to_ptr.hbm [resolvable:$true] %s54
      %57 = dma.vmem_to_hbm [thread:$0]  %s53, 16, %s55, [#allocation4]
    $region21: #{tpu_custom_call.1} parent=1 // pred_fallthru
      _
    // Predicated region
    $region22: #{tpu_custom_call.1} parent=1 // pred_check
      _
    $region23: #{tpu_custom_call.1} parent=1 // pred_check_branch
      %59 = sbr.rel (0) target = $region25
    $region24: #{tpu_custom_call.1} parent=1 // pred_region
      %61 = dma.done [#allocation4], 16
    $region25: #{tpu_custom_call.1} parent=1 // pred_fallthru
      _
    %62 = vsyncpa [#allocation3], 1
    %63 = vsyncpa [#allocation4], 1
    %64 = vsyncpa [#allocation5], 1

</llo_original>
